<compile_context>
chip_gen: v5e
topology: v5e:2x2
jax: 0.10.0
libtpu: 0.0.40
codegen_flags: <defaults>
</compile_context>

<pallas_src>
import functools

import numpy as np

import jax
import jax.numpy as jnp
from jax.experimental import pallas as pl
from jax.experimental.pallas import tpu as pltpu


def _subpixel_conv_kernel(x_ref, w_ref, b_ref, m_ref, o_ref, *,
                          shifts, img_w, block_n):
    # x_ref : (C_pad, N)          input, batch folded into lanes (N = Bt*H*W)
    # w_ref : (P*C_out, NS*C_pad) folded sub-pixel conv weights
    # b_ref : (P*C_out, 1)        bias (replicated per phase)
    # m_ref : (NS, N)             0/1 boundary masks per shift
    # o_ref : (P*C_out, N)        lane-dense output (phase-major rows)
    x = x_ref[...]
    pieces = []
    for s, (dr, dc) in enumerate(shifts):
        off = dr * img_w + dc                       # flat lane offset of this tap
        if off == 0:
            shifted = x
        else:
            # Brings x[:, l + off] to lane l; wrapped lanes are zeroed by the mask.
            shifted = pltpu.roll(x, shift=(-off) % block_n, axis=1)
        if dr == 0 and dc == 0:
            pieces.append(shifted)                  # centre tap: mask is all-ones
        else:
            pieces.append(shifted * m_ref[s:s + 1, :])
    col = jnp.concatenate(pieces, axis=0)           # (NS*C_pad, N) im2col slab
    # One MXU matmul with f32 accumulation (default precision per perf review).
    y = jnp.dot(w_ref[...], col, preferred_element_type=jnp.float32)
    y = y + b_ref[...]
    o_ref[...] = y.astype(o_ref.dtype)              # single wide store


def _choose_block_batch(batch, hw, max_lanes=4096):
    """Largest divisor of `batch` whose lane width Bt*hw stays <= max_lanes.
    No 2-step floor: a single grid step is best for small shapes on all of
    v5e/v6e (single TC) and v7x (per-core work << per-step overhead)."""
    cap = max(1, max_lanes // hw)
    divs = [d for d in range(1, batch + 1) if batch % d == 0 and d <= cap]
    return max(divs) if divs else 1


@functools.partial(jax.jit, static_argnames=("scaling_factor", "kernel_size"))
def upsample_forward(x, weight_oihw, bias, *, scaling_factor=2, kernel_size=3):
    """Forward of Upsample(mode='2D', with_conv=True): NN upsample + Conv2d('same')."""
    B, C_in, H, W = x.shape
    C_out = weight_oihw.shape[0]
    K = kernel_size
    S = scaling_factor
    assert weight_oihw.shape == (C_out, C_in, K, K)
    assert K % 2 == 1, "padding='same' implemented for odd kernel sizes"
    OH, OW = S * H, S * W
    HW = H * W
    pad = (K - 1) // 2
    P = S * S                                      # number of sub-pixel phases
    C_pad = max(8, ((C_in + 7) // 8) * 8)          # full-sublane channel tiles

    # Effective original-grid shifts used by the phase convolutions.
    d_min = (0 - pad) // S
    d_max = (S - 1 + K - 1 - pad) // S
    ndr = d_max - d_min + 1
    shifts = tuple((dr, dc) for dr in range(d_min, d_max + 1)
                   for dc in range(d_min, d_max + 1))
    NS = len(shifts)

    # ---- fold conv taps into per-phase sub-pixel weights: ONE scatter einsum ----
    A = np.zeros((P, K, K, NS), np.float32)        # constant 0/1 scatter tensor
    for ry in range(S):
        for rx in range(S):
            p = ry * S + rx
            for kh in range(K):
                for kw in range(K):
                    si = (((ry + kh - pad) // S - d_min) * ndr
                          + ((rx + kw - pad) // S - d_min))
                    A[p, kh, kw, si] = 1.0
    wf = jnp.einsum("pkls,oikl->posi", jnp.asarray(A),
                    weight_oihw.astype(jnp.float32))         # (P, C_out, NS, C_in)
    wf = jnp.pad(wf, ((0, 0), (0, 0), (0, 0), (0, C_pad - C_in)))
    w_fold = wf.reshape(P * C_out, NS * C_pad)
    bvec = jnp.tile(bias.astype(jnp.float32), P).reshape(P * C_out, 1)

    # ---- batch tiling ---------------------------------------------------------
    Bt = _choose_block_batch(B, HW)
    N = Bt * HW
    grid = (B // Bt,)
    if grid[0] > 1:
        assert N % 128 == 0, "block lane width must be a multiple of 128"

    # ---- 0/1 boundary masks per shift (trace-time constants, lane-dense) -----
    rows = np.arange(H)
    cols = np.arange(W)
    mask_rows = []
    for dr, dc in shifts:
        rm = ((rows + dr >= 0) & (rows + dr < H)).astype(np.float32)
        cm = ((cols + dc >= 0) & (cols + dc < W)).astype(np.float32)
        m = (rm[:, None] * cm[None, :]).reshape(HW)
        mask_rows.append(np.tile(m, Bt))
    masks = jnp.asarray(np.stack(mask_rows, axis=0))          # (NS, N)

    # ---- input: batch folded into lanes, channels padded to C_pad ------------
    x_cb = jnp.transpose(x.reshape(B, C_in, HW), (1, 0, 2)).reshape(C_in, B * HW)
    x_cb = jnp.pad(x_cb, ((0, C_pad - C_in), (0, 0)))         # (C_pad, B*HW)

    kernel = functools.partial(_subpixel_conv_kernel,
                               shifts=shifts, img_w=W, block_n=N)

    out_flat = pl.pallas_call(
        kernel,
        out_shape=jax.ShapeDtypeStruct((P * C_out, B * HW), x.dtype),
        grid_spec=pltpu.PrefetchScalarGridSpec(
            num_scalar_prefetch=0,
            grid=grid,
            in_specs=[
                pl.BlockSpec((C_pad, N), lambda g: (0, g)),
                pl.BlockSpec((P * C_out, NS * C_pad), lambda g: (0, 0)),
                pl.BlockSpec((P * C_out, 1), lambda g: (0, 0)),
                pl.BlockSpec((NS, N), lambda g: (0, 0)),
            ],
            out_specs=pl.BlockSpec((P * C_out, N), lambda g: (0, g)),
        ),
        compiler_params=pltpu.CompilerParams(
            dimension_semantics=("parallel",)),
    )(x_cb, w_fold, bvec, masks)

    # De-interleave sub-pixel phases (layout plumbing only):
    # (S, S, C_out, B, H, W) -> (B, C_out, H, S, W, S) -> (B, C_out, OH, OW)
    out = out_flat.reshape(S, S, C_out, B, H, W)
    out = jnp.transpose(out, (3, 2, 4, 0, 5, 1)).reshape(B, C_out, OH, OW)
    return out


def upsample_reference(x, weight_oihw, bias, scaling_factor):
    """Pure-JAX reference: nn.Upsample(nearest) + Conv2d(padding='same')."""
    xu = jnp.repeat(jnp.repeat(x, scaling_factor, axis=2), scaling_factor, axis=3)
    out = jax.lax.conv_general_dilated(
        xu, weight_oihw, window_strides=(1, 1), padding="SAME",
        dimension_numbers=("NCHW", "OIHW", "NCHW"),
        precision=jax.lax.Precision.HIGHEST)
    return out + bias[None, :, None, None]


if __name__ == "__main__":
    B, C_in, H, W = 2, 4, 16, 16
    C_out, K, S = 4, 3, 2

    key = jax.random.PRNGKey(0)
    kx, kw, kb = jax.random.split(key, 3)
    x = jax.random.normal(kx, (B, C_in, H, W), dtype=jnp.float32)

    # Deterministic Conv2d init matching PyTorch's default (uniform(+-1/sqrt(fan_in))).
    fan_in = C_in * K * K
    bound = 1.0 / (fan_in ** 0.5)
    weight = jax.random.uniform(kw, (C_out, C_in, K, K), jnp.float32, -bound, bound)
    bias = jax.random.uniform(kb, (C_out,), jnp.float32, -bound, bound)

    out = upsample_forward(x, weight, bias, scaling_factor=S, kernel_size=K)
    out = jax.block_until_ready(out)
    assert out.shape == (B, C_out, S * H, S * W), out.shape

    ref = upsample_reference(x, weight, bias, S)
    max_err = float(jnp.max(jnp.abs(out - ref)))
    # Default-precision MXU matmul (bf16 passes, f32 accumulate) vs f32 reference.
    assert max_err < 2e-2, f"max abs err {max_err}"

    print("KERNEL_OK")
</pallas_src>

<mosaic_0001>
module attributes {stable_mosaic.version = 11 : i64} {
  func.func @_subpixel_conv_kernel(%arg0: i32, %arg1: memref<8x512xf32, #tpu.memory_space<vmem>>, %arg2: memref<16x72xf32, #tpu.memory_space<vmem>>, %arg3: memref<16x1xf32, #tpu.memory_space<vmem>>, %arg4: memref<9x512xf32, #tpu.memory_space<vmem>>, %arg5: memref<16x512xf32, #tpu.memory_space<vmem>>) attributes {dimension_semantics = [#tpu.dimension_semantics<parallel>], iteration_bounds = array<i64: 1>, scalar_prefetch = 0 : i64, scratch_operands = 0 : i64, tpu.core_type = #tpu.core_type<tc>, window_params = [{transform_indices = @transform_0, window_bounds = array<i64: 8, 512>}, {pipeline_mode = #tpu.pipeline_mode<synchronous>, transform_indices = @transform_1, window_bounds = array<i64: 16, 72>}, {pipeline_mode = #tpu.pipeline_mode<synchronous>, transform_indices = @transform_2, window_bounds = array<i64: 16, 1>}, {pipeline_mode = #tpu.pipeline_mode<synchronous>, transform_indices = @transform_3, window_bounds = array<i64: 9, 512>}, {transform_indices = @transform_4, window_bounds = array<i64: 16, 512>}]} {
    %c0 = arith.constant 0 : index
    %c0_0 = arith.constant 0 : index
    %0 = vector.load %arg1[%c0, %c0_0] : memref<8x512xf32, #tpu.memory_space<vmem>>, vector<8x512xf32>
    %c17_i32 = arith.constant 17 : i32
    %1 = tpu.dynamic_rotate %0 by %c17_i32 dim 1 : vector<8x512xf32>, i32 -> vector<8x512xf32>
    %c0_1 = arith.constant 0 : index
    %c0_2 = arith.constant 0 : index
    %2 = vector.load %arg4[%c0_1, %c0_2] : memref<9x512xf32, #tpu.memory_space<vmem>>, vector<1x512xf32>
    %3 = vector.broadcast %2 : vector<1x512xf32> to vector<8x512xf32>
    %4 = arith.mulf %1, %3 : vector<8x512xf32>
    %c16_i32 = arith.constant 16 : i32
    %5 = tpu.dynamic_rotate %0 by %c16_i32 dim 1 : vector<8x512xf32>, i32 -> vector<8x512xf32>
    %c1 = arith.constant 1 : index
    %c0_3 = arith.constant 0 : index
    %6 = vector.load %arg4[%c1, %c0_3] : memref<9x512xf32, #tpu.memory_space<vmem>>, vector<1x512xf32>
    %7 = vector.broadcast %6 : vector<1x512xf32> to vector<8x512xf32>
    %8 = arith.mulf %5, %7 : vector<8x512xf32>
    %c15_i32 = arith.constant 15 : i32
    %9 = tpu.dynamic_rotate %0 by %c15_i32 dim 1 : vector<8x512xf32>, i32 -> vector<8x512xf32>
    %c2 = arith.constant 2 : index
    %c0_4 = arith.constant 0 : index
    %10 = vector.load %arg4[%c2, %c0_4] : memref<9x512xf32, #tpu.memory_space<vmem>>, vector<1x512xf32>
    %11 = vector.broadcast %10 : vector<1x512xf32> to vector<8x512xf32>
    %12 = arith.mulf %9, %11 : vector<8x512xf32>
    %c1_i32 = arith.constant 1 : i32
    %13 = tpu.dynamic_rotate %0 by %c1_i32 dim 1 : vector<8x512xf32>, i32 -> vector<8x512xf32>
    %c3 = arith.constant 3 : index
    %c0_5 = arith.constant 0 : index
    %14 = vector.load %arg4[%c3, %c0_5] : memref<9x512xf32, #tpu.memory_space<vmem>>, vector<1x512xf32>
    %15 = vector.broadcast %14 : vector<1x512xf32> to vector<8x512xf32>
    %16 = arith.mulf %13, %15 : vector<8x512xf32>
    %c511_i32 = arith.constant 511 : i32
    %17 = tpu.dynamic_rotate %0 by %c511_i32 dim 1 : vector<8x512xf32>, i32 -> vector<8x512xf32>
    %c5 = arith.constant 5 : index
    %c0_6 = arith.constant 0 : index
    %18 = vector.load %arg4[%c5, %c0_6] : memref<9x512xf32, #tpu.memory_space<vmem>>, vector<1x512xf32>
    %19 = vector.broadcast %18 : vector<1x512xf32> to vector<8x512xf32>
    %20 = arith.mulf %17, %19 : vector<8x512xf32>
    %c497_i32 = arith.constant 497 : i32
    %21 = tpu.dynamic_rotate %0 by %c497_i32 dim 1 : vector<8x512xf32>, i32 -> vector<8x512xf32>
    %c6 = arith.constant 6 : index
    %c0_7 = arith.constant 0 : index
    %22 = vector.load %arg4[%c6, %c0_7] : memref<9x512xf32, #tpu.memory_space<vmem>>, vector<1x512xf32>
    %23 = vector.broadcast %22 : vector<1x512xf32> to vector<8x512xf32>
    %24 = arith.mulf %21, %23 : vector<8x512xf32>
    %c496_i32 = arith.constant 496 : i32
    %25 = tpu.dynamic_rotate %0 by %c496_i32 dim 1 : vector<8x512xf32>, i32 -> vector<8x512xf32>
    %c7 = arith.constant 7 : index
    %c0_8 = arith.constant 0 : index
    %26 = vector.load %arg4[%c7, %c0_8] : memref<9x512xf32, #tpu.memory_space<vmem>>, vector<1x512xf32>
    %27 = vector.broadcast %26 : vector<1x512xf32> to vector<8x512xf32>
    %28 = arith.mulf %25, %27 : vector<8x512xf32>
    %c495_i32 = arith.constant 495 : i32
    %29 = tpu.dynamic_rotate %0 by %c495_i32 dim 1 : vector<8x512xf32>, i32 -> vector<8x512xf32>
    %c8 = arith.constant 8 : index
    %c0_9 = arith.constant 0 : index
    %30 = vector.load %arg4[%c8, %c0_9] : memref<9x512xf32, #tpu.memory_space<vmem>>, vector<1x512xf32>
    %31 = vector.broadcast %30 : vector<1x512xf32> to vector<8x512xf32>
    %32 = arith.mulf %29, %31 : vector<8x512xf32>
    %33 = tpu.concatenate %4, %8, %12, %16, %0, %20, %24, %28, %32 in 0 : vector<8x512xf32>, vector<8x512xf32>, vector<8x512xf32>, vector<8x512xf32>, vector<8x512xf32>, vector<8x512xf32>, vector<8x512xf32>, vector<8x512xf32>, vector<8x512xf32> -> vector<72x512xf32>
    %c0_10 = arith.constant 0 : index
    %c0_11 = arith.constant 0 : index
    %34 = vector.load %arg2[%c0_10, %c0_11] : memref<16x72xf32, #tpu.memory_space<vmem>>, vector<16x72xf32>
    %cst = arith.constant dense<0.000000e+00> : vector<16x512xf32>
    %35 = tpu.matmul %34, %33, %cst {dimension_numbers = #tpu.dot_dimension_numbers<[1], [0], [0], [1], [0, 0, 1, 1], [], []>} : vector<16x72xf32>, vector<72x512xf32>, vector<16x512xf32> -> vector<16x512xf32>
    %c0_12 = arith.constant 0 : index
    %c0_13 = arith.constant 0 : index
    %36 = vector.load %arg3[%c0_12, %c0_13] : memref<16x1xf32, #tpu.memory_space<vmem>>, vector<16x1xf32>
    %37 = vector.broadcast %36 : vector<16x1xf32> to vector<16x512xf32>
    %38 = arith.addf %35, %37 : vector<16x512xf32>
    %c0_14 = arith.constant 0 : index
    %c0_15 = arith.constant 0 : index
    %39 = vector.load %arg5[%c0_14, %c0_15] : memref<16x512xf32, #tpu.memory_space<vmem>>, vector<16x512xf32>
    tpu.vector_store %arg5[%c0_14, %c0_15], %38 {strides = array<i32>} : memref<16x512xf32, #tpu.memory_space<vmem>>, vector<16x512xf32>,
    return
  }
  func.func @transform_0(%arg0: i32) -> (i32, i32) {
    %c0_i32 = arith.constant 0 : i32
    %c0_i32_0 = arith.constant 0 : i32
    return %c0_i32, %arg0 : i32, i32
  }
  func.func @transform_1(%arg0: i32) -> (i32, i32) {
    %c0_i32 = arith.constant 0 : i32
    %c0_i32_0 = arith.constant 0 : i32
    %c0_i32_1 = arith.constant 0 : i32
    return %c0_i32, %c0_i32_0 : i32, i32
  }
  func.func @transform_2(%arg0: i32) -> (i32, i32) {
    %c0_i32 = arith.constant 0 : i32
    %c0_i32_0 = arith.constant 0 : i32
    %c0_i32_1 = arith.constant 0 : i32
    return %c0_i32, %c0_i32_0 : i32, i32
  }
  func.func @transform_3(%arg0: i32) -> (i32, i32) {
    %c0_i32 = arith.constant 0 : i32
    %c0_i32_0 = arith.constant 0 : i32
    %c0_i32_1 = arith.constant 0 : i32
    return %c0_i32, %c0_i32_0 : i32, i32
  }
  func.func @transform_4(%arg0: i32) -> (i32, i32) {
    %c0_i32 = arith.constant 0 : i32
    %c0_i32_0 = arith.constant 0 : i32
    return %c0_i32, %arg0 : i32, i32
  }
}

</mosaic_0001>

<llo_original>
// kernel: tile.8
$region0: #{tile.8}
  #allocation0 [shape = 's32[1]{0}', space=sflag, size = 0x4, scoped, tag = 'scoped memory for tile.8']
  %s0 = inlined_call_operand.vmem [shape: f32[4], index: 0, kind: input, shape index: {}]
  %s1 = inlined_call_operand.vmem [shape: f32[4,4], index: 1, kind: output, shape index: {}]
  // Predicated region
  $region2: #{tile.8} parent=0 // pred_check
    _
  $region3: #{tile.8} parent=0 // pred_check_branch
    %3 = sbr.rel (0) target = $region5
  $region4: #{tile.8} parent=0 // pred_region
    _
  $region5: #{tile.8} parent=0 // pred_fallthru
    _
  %v4 = vld [vmem:[%s0] ss:$0 sm:$0xff]
  %5 = vst [vmem:[%s1] sm:$0xf] %v4

// kernel: tile.0
$region0: #{tile.0}
  %s0 = inlined_call_operand.vmem [shape: f32[4,4], index: 0, kind: input, shape index: {}]
  %s1 = inlined_call_operand.vmem [shape: f32[16,1], index: 1, kind: output, shape index: {}]
  $region1: #{tile.0} parent=0
    #allocation0 [shape = 'u8[4096]{0}', space=vmem, size = 0x1000, scoped, tag = 'scoped mem for input reshape']
    %s3 = ssub.s32 16, 1
    %v4 = vld [vmem:[%s0] sm:%s3]
    %5 = vst [vmem:[#allocation0] sm:%s3] %v4
    %v6 = vld [vmem:[#allocation0] sm:$0xf]
    %vm7 = vcmask 7168
    %8 = vst.msk [vmem:[%s1] ss:$4 sm:$0xf] %vm7, %v6
    %v9 = vld [vmem:[#allocation0] sm:$0xf]
    %10 = vrot.lane.b32.xlu0 %v9, 127
    %v11 = vpop.permute.xlu0 %10
    %vm12 = vcmask 7168
    %s13 = scalar_lea.vmem %s1, 1
    %14 = vst.msk [vmem:[%s13] ss:$4 sm:$0xf] %vm12, %v11
    %v15 = vld [vmem:[#allocation0] sm:$0xf]
    %16 = vrot.lane.b32.xlu0 %v15, 126
    %v17 = vpop.permute.xlu0 %16
    %vm18 = vcmask 7168
    %s19 = scalar_lea.vmem %s1, 2
    %20 = vst.msk [vmem:[%s19] ss:$4 sm:$0xf] %vm18, %v17
    %v21 = vld [vmem:[#allocation0] sm:$0xf]
    %22 = vrot.lane.b32.xlu0 %v21, 125
    %v23 = vpop.permute.xlu0 %22
    %vm24 = vcmask 7168
    %s25 = scalar_lea.vmem %s1, 3
    %26 = vst.msk [vmem:[%s25] ss:$4 sm:$0xf] %vm24, %v23

// kernel: upsample_forward.1
$region0: #{upsample_forward.1}
  #allocation0 [shape = 'u32[]', space=smem, size = 0x4, offset = 0x4, fixed_abs, tag = 'smem constant byte address 0x4 - core index']
  #allocation1 [shape = 'u32[72,128]{1,0:T(1,128)}', space=vmem, size = 0x9000, scoped, tag = 'internal scratch']
  %s0 = inlined_call_operand.vmem [shape: f32[8,512], index: 0, kind: input, shape index: {}]
  %s1 = inlined_call_operand.vmem [shape: f32[16,72], index: 1, kind: input, shape index: {}]
  %s2 = inlined_call_operand.vmem [shape: f32[16,1], index: 2, kind: input, shape index: {}]
  %s3 = inlined_call_operand.vmem [shape: f32[9,512], index: 3, kind: input, shape index: {}]
  %s4 = inlined_call_operand.vmem [shape: f32[16,512], index: 4, kind: output, shape index: {}]
  %s5 = sld [smem:[#allocation0]]
  $region26: #{upsample_forward.1} parent=0
    _
  %s7 = ssub.s32 1, %s5
  %s8 = scalar_select 0, %s7, %s5
  // Predicated region
  $region2: #{upsample_forward.1} parent=0 // pred_check
    _
  $region3: #{upsample_forward.1} parent=0 // pred_check_branch
    %10 = sbr.rel (0) target = $region5
  $region4: #{upsample_forward.1} parent=0 // pred_region
    _
  $region5: #{upsample_forward.1} parent=0 // pred_fallthru
    _
  // Predicated region
  $region6: #{upsample_forward.1} parent=0 // pred_check
    _
  $region7: #{upsample_forward.1} parent=0 // pred_check_branch
    %12 = sbr.rel (0) target = $region9
  $region8: #{upsample_forward.1} parent=0 // pred_region
    _
  $region9: #{upsample_forward.1} parent=0 // pred_fallthru
    _
  // Predicated region
  $region10: #{upsample_forward.1} parent=0 // pred_check
    _
  $region11: #{upsample_forward.1} parent=0 // pred_check_branch
    %14 = sbr.rel (0) target = $region13
  $region12: #{upsample_forward.1} parent=0 // pred_region
    _
  $region13: #{upsample_forward.1} parent=0 // pred_fallthru
    _
  // Predicated region
  $region14: #{upsample_forward.1} parent=0 // pred_check
    _
  $region15: #{upsample_forward.1} parent=0 // pred_check_branch
    %16 = sbr.rel (0) target = $region17
  $region16: #{upsample_forward.1} parent=0 // pred_region
    _
  $region17: #{upsample_forward.1} parent=0 // pred_fallthru
    _
  %v17 = vld [vmem:[%s0] sm:$0xff]
  %v18 = vld [vmem:[%s0 + $0x8] sm:$0xff]
  %v19 = vld [vmem:[%s0 + $0x10] sm:$0xff]
  %v20 = vld [vmem:[%s0 + $0x18] sm:$0xff]
  %21 = vrot.lane.b32.xlu0 %v17, 17
  %v22 = vpop.permute.xlu0 %21
  %23 = vrot.lane.b32.xlu0 %v18, 17
  %v24 = vpop.permute.xlu0 %23
  %25 = vrot.lane.b32.xlu0 %v19, 17
  %v26 = vpop.permute.xlu0 %25
  %27 = vrot.lane.b32.xlu0 %v20, 17
  %v28 = vpop.permute.xlu0 %27
  %v29 = vlaneseq
  %v30 = vand.u32 %v29, 127
  %vm31 = vcmp.lt.s32.totalorder %v30, 17
  %v32 = vsel %vm31, %v26, %v28
  %v33 = vsel %vm31, %v24, %v26
  %v34 = vsel %vm31, %v22, %v24
  %v35 = vsel %vm31, %v28, %v22
  %v36 = vld [vmem:[%s3] ss:$8 sm:$0xf]
  %v38 = vperm.slane %v36, 0
  %v39 = vperm.slane %v36, 1
  %v40 = vperm.slane %v36, 2
  %v41 = vperm.slane %v36, 3
  %v46 = vmul.f32 %v35, %v38
  %v47 = vmul.f32 %v34, %v39
  %v48 = vmul.f32 %v33, %v40
  %v49 = vmul.f32 %v32, %v41
  %50 = vrot.lane.b32.xlu0 %v17, 16
  %v51 = vpop.permute.xlu0 %50
  %52 = vrot.lane.b32.xlu0 %v18, 16
  %v53 = vpop.permute.xlu0 %52
  %54 = vrot.lane.b32.xlu0 %v19, 16
  %v55 = vpop.permute.xlu0 %54
  %56 = vrot.lane.b32.xlu0 %v20, 16
  %v57 = vpop.permute.xlu0 %56
  %vm58 = vcmp.lt.s32.totalorder %v30, 16
  %v59 = vsel %vm58, %v55, %v57
  %v60 = vsel %vm58, %v53, %v55
  %v61 = vsel %vm58, %v51, %v53
  %v62 = vsel %vm58, %v57, %v51
  %s63 = scalar_lea.vmem %s3, 1
  %v64 = vld [vmem:[%s63] ss:$8 sm:$0xf]
  %v66 = vperm.slane %v64, 0
  %v67 = vperm.slane %v64, 1
  %v68 = vperm.slane %v64, 2
  %v69 = vperm.slane %v64, 3
  %v74 = vmul.f32 %v62, %v66
  %v75 = vmul.f32 %v61, %v67
  %v76 = vmul.f32 %v60, %v68
  %v77 = vmul.f32 %v59, %v69
  %78 = vrot.lane.b32.xlu0 %v17, 15
  %v79 = vpop.permute.xlu0 %78
  %80 = vrot.lane.b32.xlu0 %v18, 15
  %v81 = vpop.permute.xlu0 %80
  %82 = vrot.lane.b32.xlu0 %v19, 15
  %v83 = vpop.permute.xlu0 %82
  %84 = vrot.lane.b32.xlu0 %v20, 15
  %v85 = vpop.permute.xlu0 %84
  %vm86 = vcmp.lt.s32.totalorder %v30, 15
  %v87 = vsel %vm86, %v83, %v85
  %v88 = vsel %vm86, %v81, %v83
  %v89 = vsel %vm86, %v79, %v81
  %v90 = vsel %vm86, %v85, %v79
  %s91 = scalar_lea.vmem %s3, 2
  %v92 = vld [vmem:[%s91] ss:$8 sm:$0xf]
  %v94 = vperm.slane %v92, 0
  %v95 = vperm.slane %v92, 1
  %v96 = vperm.slane %v92, 2
  %v97 = vperm.slane %v92, 3
  %v102 = vmul.f32 %v90, %v94
  %v103 = vmul.f32 %v89, %v95
  %v104 = vmul.f32 %v88, %v96
  %v105 = vmul.f32 %v87, %v97
  %106 = vrot.lane.b32.xlu0 %v17, 1
  %v107 = vpop.permute.xlu0 %106
  %108 = vrot.lane.b32.xlu0 %v18, 1
  %v109 = vpop.permute.xlu0 %108
  %110 = vrot.lane.b32.xlu0 %v19, 1
  %v111 = vpop.permute.xlu0 %110
  %112 = vrot.lane.b32.xlu0 %v20, 1
  %v113 = vpop.permute.xlu0 %112
  %vm114 = vcmp.lt.s32.totalorder %v30, 1
  %v115 = vsel %vm114, %v111, %v113
  %v116 = vsel %vm114, %v109, %v111
  %v117 = vsel %vm114, %v107, %v109
  %v118 = vsel %vm114, %v113, %v107
  %s119 = scalar_lea.vmem %s3, 3
  %v120 = vld [vmem:[%s119] ss:$8 sm:$0xf]
  %v122 = vperm.slane %v120, 0
  %v123 = vperm.slane %v120, 1
  %v124 = vperm.slane %v120, 2
  %v125 = vperm.slane %v120, 3
  %v130 = vmul.f32 %v118, %v122
  %v131 = vmul.f32 %v117, %v123
  %v132 = vmul.f32 %v116, %v124
  %v133 = vmul.f32 %v115, %v125
  %134 = vrot.lane.b32.xlu0 %v17, 127
  %v135 = vpop.permute.xlu0 %134
  %136 = vrot.lane.b32.xlu0 %v18, 127
  %v137 = vpop.permute.xlu0 %136
  %138 = vrot.lane.b32.xlu0 %v19, 127
  %v139 = vpop.permute.xlu0 %138
  %140 = vrot.lane.b32.xlu0 %v20, 127
  %v141 = vpop.permute.xlu0 %140
  %vm142 = vcmp.lt.s32.totalorder %v30, 127
  %v143 = vsel %vm142, %v139, %v141
  %v144 = vsel %vm142, %v137, %v139
  %v145 = vsel %vm142, %v135, %v137
  %v146 = vsel %vm142, %v141, %v135
  %s147 = scalar_lea.vmem %s3, 5
  %v148 = vld [vmem:[%s147] ss:$8 sm:$0xf]
  %v150 = vperm.slane %v148, 0
  %v151 = vperm.slane %v148, 1
  %v152 = vperm.slane %v148, 2
  %v153 = vperm.slane %v148, 3
  %v158 = vmul.f32 %v145, %v150
  %v159 = vmul.f32 %v144, %v151
  %v160 = vmul.f32 %v143, %v152
  %v161 = vmul.f32 %v146, %v153
  %162 = vrot.lane.b32.xlu0 %v17, 113
  %v163 = vpop.permute.xlu0 %162
  %164 = vrot.lane.b32.xlu0 %v18, 113
  %v165 = vpop.permute.xlu0 %164
  %166 = vrot.lane.b32.xlu0 %v19, 113
  %v167 = vpop.permute.xlu0 %166
  %168 = vrot.lane.b32.xlu0 %v20, 113
  %v169 = vpop.permute.xlu0 %168
  %vm170 = vcmp.lt.s32.totalorder %v30, 113
  %v171 = vsel %vm170, %v167, %v169
  %v172 = vsel %vm170, %v165, %v167
  %v173 = vsel %vm170, %v163, %v165
  %v174 = vsel %vm170, %v169, %v163
  %s175 = scalar_lea.vmem %s3, 6
  %v176 = vld [vmem:[%s175] ss:$8 sm:$0xf]
  %v178 = vperm.slane %v176, 0
  %v179 = vperm.slane %v176, 1
  %v180 = vperm.slane %v176, 2
  %v181 = vperm.slane %v176, 3
  %v186 = vmul.f32 %v173, %v178
  %v187 = vmul.f32 %v172, %v179
  %v188 = vmul.f32 %v171, %v180
  %v189 = vmul.f32 %v174, %v181
  %190 = vrot.lane.b32.xlu0 %v17, 112
  %v191 = vpop.permute.xlu0 %190
  %192 = vrot.lane.b32.xlu0 %v18, 112
  %v193 = vpop.permute.xlu0 %192
  %194 = vrot.lane.b32.xlu0 %v19, 112
  %v195 = vpop.permute.xlu0 %194
  %196 = vrot.lane.b32.xlu0 %v20, 112
  %v197 = vpop.permute.xlu0 %196
  %vm198 = vcmp.lt.s32.totalorder %v30, 112
  %v199 = vsel %vm198, %v195, %v197
  %v200 = vsel %vm198, %v193, %v195
  %v201 = vsel %vm198, %v191, %v193
  %v202 = vsel %vm198, %v197, %v191
  %s203 = scalar_lea.vmem %s3, 7
  %v204 = vld [vmem:[%s203] ss:$8 sm:$0xf]
  %v206 = vperm.slane %v204, 0
  %v207 = vperm.slane %v204, 1
  %v208 = vperm.slane %v204, 2
  %v209 = vperm.slane %v204, 3
  %v214 = vmul.f32 %v201, %v206
  %v215 = vmul.f32 %v200, %v207
  %v216 = vmul.f32 %v199, %v208
  %v217 = vmul.f32 %v202, %v209
  %218 = vrot.lane.b32.xlu0 %v17, 111
  %v219 = vpop.permute.xlu0 %218
  %220 = vrot.lane.b32.xlu0 %v18, 111
  %v221 = vpop.permute.xlu0 %220
  %222 = vrot.lane.b32.xlu0 %v19, 111
  %v223 = vpop.permute.xlu0 %222
  %224 = vrot.lane.b32.xlu0 %v20, 111
  %v225 = vpop.permute.xlu0 %224
  %vm226 = vcmp.lt.s32.totalorder %v30, 111
  %v227 = vsel %vm226, %v223, %v225
  %v228 = vsel %vm226, %v221, %v223
  %v229 = vsel %vm226, %v219, %v221
  %v230 = vsel %vm226, %v225, %v219
  %s231 = scalar_lea.vmem %s3, 32
  %v232 = vld [vmem:[%s231] ss:$8 sm:$0xf]
  %v234 = vperm.slane %v232, 0
  %v235 = vperm.slane %v232, 1
  %v236 = vperm.slane %v232, 2
  %v237 = vperm.slane %v232, 3
  %v242 = vmul.f32 %v229, %v234
  %v243 = vmul.f32 %v228, %v235
  %v244 = vmul.f32 %v227, %v236
  %v245 = vmul.f32 %v230, %v237
  %v246 = vld [vmem:[%s1] sm:$0xff]
  %v247 = vld [vmem:[%s1 + $0x8] sm:$0xff]
  %v248 = vld [vmem:[%s2] sm:$0xff]
  %v249 = vld [vmem:[%s2 + $0x8] sm:$0xff]
  %251 = vset.pattern.permute.xlu0 0
  %252 = vperm.xlu0 %251, %v248
  %v253 = vpop.permute.xlu0 %252
  %256 = vset.pattern.permute.xlu0 0
  %257 = vperm.xlu0 %256, %v249
  %v258 = vpop.permute.xlu0 %257
  %vm260 = vcmask 588800
  %v262 = vsel %vm260, %v246, 0
  %v265 = vsel %vm260, %v247, 0
  %267 = vmatpush.msra.mxu0 0.0
  %268 = vmatpush.msra.mxu0 0.0
  %269 = vmatpush.msra.mxu0 0.0
  %270 = vmatpush.msra.mxu0 0.0
  %271 = vmatpush.msra.mxu0 0.0
  %272 = vmatpush.msra.mxu0 0.0
  %273 = vmatpush.msra.mxu0 0.0
  %274 = vmatpush.msra.mxu0 %v242
  %275 = vmatpush.msra.mxu0 %v214
  %276 = vmatpush.msra.mxu0 %v186
  %277 = vmatpush.msra.mxu0 %v158
  %278 = vmatpush.msra.mxu0 %v17
  %279 = vmatpush.msra.mxu0 %v130
  %280 = vmatpush.msra.mxu0 %v102
  %281 = vmatpush.msra.mxu0 %v74
  %282 = vmatpush.msra.mxu0 %v46
  %283 = vmatmul.f32.gmra.mxu0 %v262
  %v284 = vpop.f32.mrf.mxu0
  %v285 = vadd.f32 %v253, %v284
  %286 = vmatmul.f32.gmra.mxu0 %v265
  %v287 = vpop.f32.mrf.mxu0
  %v288 = vadd.f32 %v258, %v287
  %289 = vdwg.mxu0
  %290 = vmatpush.msra.mxu0 0.0
  %291 = vmatpush.msra.mxu0 0.0
  %292 = vmatpush.msra.mxu0 0.0
  %293 = vmatpush.msra.mxu0 0.0
  %294 = vmatpush.msra.mxu0 0.0
  %295 = vmatpush.msra.mxu0 0.0
  %296 = vmatpush.msra.mxu0 0.0
  %297 = vmatpush.msra.mxu0 %v243
  %298 = vmatpush.msra.mxu0 %v215
  %299 = vmatpush.msra.mxu0 %v187
  %300 = vmatpush.msra.mxu0 %v159
  %301 = vmatpush.msra.mxu0 %v18
  %302 = vmatpush.msra.mxu0 %v131
  %303 = vmatpush.msra.mxu0 %v103
  %304 = vmatpush.msra.mxu0 %v75
  %305 = vmatpush.msra.mxu0 %v47
  %306 = vmatmul.f32.gmra.mxu0 %v262
  %v307 = vpop.f32.mrf.mxu0
  %v308 = vadd.f32 %v253, %v307
  %309 = vmatmul.f32.gmra.mxu0 %v265
  %v310 = vpop.f32.mrf.mxu0
  %v311 = vadd.f32 %v258, %v310
  %312 = vdwg.mxu0
  %313 = vmatpush.msra.mxu0 0.0
  %314 = vmatpush.msra.mxu0 0.0
  %315 = vmatpush.msra.mxu0 0.0
  %316 = vmatpush.msra.mxu0 0.0
  %317 = vmatpush.msra.mxu0 0.0
  %318 = vmatpush.msra.mxu0 0.0
  %319 = vmatpush.msra.mxu0 0.0
  %320 = vmatpush.msra.mxu0 %v244
  %321 = vmatpush.msra.mxu0 %v216
  %322 = vmatpush.msra.mxu0 %v188
  %323 = vmatpush.msra.mxu0 %v160
  %324 = vmatpush.msra.mxu0 %v19
  %325 = vmatpush.msra.mxu0 %v132
  %326 = vmatpush.msra.mxu0 %v104
  %327 = vmatpush.msra.mxu0 %v76
  %328 = vmatpush.msra.mxu0 %v48
  %329 = vmatmul.f32.gmra.mxu0 %v262
  %v330 = vpop.f32.mrf.mxu0
  %v331 = vadd.f32 %v253, %v330
  %332 = vmatmul.f32.gmra.mxu0 %v265
  %v333 = vpop.f32.mrf.mxu0
  %v334 = vadd.f32 %v258, %v333
  %335 = vdwg.mxu0
  %336 = vmatpush.msra.mxu0 0.0
  %337 = vmatpush.msra.mxu0 0.0
  %338 = vmatpush.msra.mxu0 0.0
  %339 = vmatpush.msra.mxu0 0.0
  %340 = vmatpush.msra.mxu0 0.0
  %341 = vmatpush.msra.mxu0 0.0
  %342 = vmatpush.msra.mxu0 0.0
  %343 = vmatpush.msra.mxu0 %v245
  %344 = vmatpush.msra.mxu0 %v217
  %345 = vmatpush.msra.mxu0 %v189
  %346 = vmatpush.msra.mxu0 %v161
  %347 = vmatpush.msra.mxu0 %v20
  %348 = vmatpush.msra.mxu0 %v133
  %349 = vmatpush.msra.mxu0 %v105
  %350 = vmatpush.msra.mxu0 %v77
  %351 = vmatpush.msra.mxu0 %v49
  %352 = vmatmul.f32.gmra.mxu0 %v262
  %v353 = vpop.f32.mrf.mxu0
  %v354 = vadd.f32 %v253, %v353
  %355 = vmatmul.f32.gmra.mxu0 %v265
  %v356 = vpop.f32.mrf.mxu0
  %v357 = vadd.f32 %v258, %v356
  %358 = vdwg.mxu0
  %359 = vst [vmem:[%s4] sm:$0xff] %v285
  %360 = vst [vmem:[%s4 + $0x8] sm:$0xff] %v308
  %361 = vst [vmem:[%s4 + $0x10] sm:$0xff] %v331
  %362 = vst [vmem:[%s4 + $0x18] sm:$0xff] %v354
  %363 = vst [vmem:[%s4 + $0x20] sm:$0xff] %v288
  %364 = vst [vmem:[%s4 + $0x28] sm:$0xff] %v311
  %365 = vst [vmem:[%s4 + $0x30] sm:$0xff] %v334
  %366 = vst [vmem:[%s4 + $0x38] sm:$0xff] %v357
  // Predicated region
  $region18: #{upsample_forward.1} parent=0 // pred_check
    _
  $region19: #{upsample_forward.1} parent=0 // pred_check_branch
    %368 = sbr.rel (0) target = $region21
  $region20: #{upsample_forward.1} parent=0 // pred_region
    _
  $region21: #{upsample_forward.1} parent=0 // pred_fallthru
    _
  // Predicated region
  $region22: #{upsample_forward.1} parent=0 // pred_check
    _
  $region23: #{upsample_forward.1} parent=0 // pred_check_branch
    %370 = sbr.rel (0) target = $region25
  $region24: #{upsample_forward.1} parent=0 // pred_region
    _
  $region25: #{upsample_forward.1} parent=0 // pred_fallthru
    _

</llo_original>
